<compile_context>
chip_gen: v7x
topology: tpu7x:2x2x1
jax: 0.10.0
libtpu: 0.0.40
codegen_flags: <defaults>
</compile_context>

<pallas_src>
import functools

import jax
import jax.numpy as jnp
from jax import lax
from jax.experimental import pallas as pl
from jax.experimental.pallas import tpu as pltpu

FILTERS = 16


def _basic_block_kernel(x_ref, w1_ref, b1_ref, w2_ref, b2_ref, o_ref,
                        *, H, W, C):
    HW = H * W
    P = W + 1                      # zero-extension wide enough for any 3x3 tap

    x_t = x_ref[0]                 # (C, HW), lane-dense (HW on lanes)

    # Column index (w) of every spatial position; masks for horizontal taps.
    w_idx = lax.broadcasted_iota(jnp.int32, (C, HW), 1) % W
    not_left = w_idx >= 1          # valid positions for a dx = -1 tap
    not_right = w_idx < (W - 1)    # valid positions for a dx = +1 tap
    zpad = jnp.zeros((C, P), jnp.float32)

    def im2col(a):                 # a: (C, HW) -> (9*C, HW)
        xe = jnp.concatenate([zpad, a, zpad], axis=1)      # (C, HW + 2P)
        taps = []
        for ky in range(3):
            for kx in range(3):
                s = (ky - 1) * W + (kx - 1)
                t = xe[:, P + s: P + s + HW]               # shifted view, (C, HW)
                if kx == 0:                                # dx = -1
                    t = jnp.where(not_left, t, 0.0)
                elif kx == 2:                              # dx = +1
                    t = jnp.where(not_right, t, 0.0)
                taps.append(t)
        # Sublane-aligned stack (each tap is C=16 rows): cheap concatenation.
        return jnp.concatenate(taps, axis=0)               # (9*C, HW)

    # conv1 (+ folded BN1 scale in weights) + bias + ReLU
    h1 = jnp.dot(w1_ref[...], im2col(x_t),
                 preferred_element_type=jnp.float32)        # (C, HW)
    h1 = jnp.maximum(h1 + b1_ref[...], 0.0)

    # conv2 (+ folded BN2 scale) + bias
    h2 = jnp.dot(w2_ref[...], im2col(h1),
                 preferred_element_type=jnp.float32)        # (C, HW)
    h2 = h2 + b2_ref[...]

    # residual add + final ReLU; store is lane-dense (C, HW) = (16, 256)
    o_ref[0] = jnp.maximum(h2 + x_t, 0.0)


def basic_block_pallas(x_nchw, w1_mat, b1_col, w2_mat, b2_col):
    """x_nchw: (N, C, H, W) f32.  w*_mat: (C, 9*C) BN-folded weights.
    b*_col: (C, 1) folded biases.  Returns (N, C, H, W) f32."""
    N, C, H, W = x_nchw.shape
    x_r = x_nchw.reshape(N, C, H * W).astype(jnp.float32)   # flattened NCHW

    kernel = functools.partial(_basic_block_kernel, H=H, W=W, C=C)

    out = pl.pallas_call(
        kernel,
        out_shape=jax.ShapeDtypeStruct((N, C, H * W), jnp.float32),
        grid_spec=pltpu.PrefetchScalarGridSpec(
            num_scalar_prefetch=0,
            grid=(N,),
            in_specs=[
                pl.BlockSpec((1, C, H * W), lambda n: (n, 0, 0)),   # x
                pl.BlockSpec((C, 9 * C), lambda n: (0, 0)),         # w1 (folded)
                pl.BlockSpec((C, 1), lambda n: (0, 0)),             # b1
                pl.BlockSpec((C, 9 * C), lambda n: (0, 0)),         # w2 (folded)
                pl.BlockSpec((C, 1), lambda n: (0, 0)),             # b2
            ],
            out_specs=pl.BlockSpec((1, C, H * W), lambda n: (n, 0, 0)),
        ),
        compiler_params=pltpu.CompilerParams(
            dimension_semantics=("parallel",)),
    )(x_r, w1_mat, b1_col, w2_mat, b2_col)

    return out.reshape(N, C, H, W)


def fold_conv_bn(w_oihw, conv_b, gamma, beta, mean, var, eps):
    """Fold eval-mode BN into the conv: returns ((C_out, 9*C_in) weight matrix
    whose rows are ordered (ky, kx, in_channel), and a (C_out, 1) bias)."""
    s = gamma / jnp.sqrt(var + eps)                          # (C_out,)
    w = w_oihw * s[:, None, None, None]                      # scale out channels
    w_mat = jnp.transpose(w, (0, 2, 3, 1)).reshape(w.shape[0], -1)  # (C, 9*C)
    b = beta + (conv_b - mean) * s
    return w_mat.astype(jnp.float32), b.reshape(-1, 1).astype(jnp.float32)


def _reference(x_nchw, w1_hwio, cb1, g1, be1, m1, v1,
               w2_hwio, cb2, g2, be2, m2, v2, eps):
    """Plain-JAX reference matching PyTorch eval-mode forward."""
    x = jnp.transpose(x_nchw, (0, 2, 3, 1))
    dn = ('NHWC', 'HWIO', 'NHWC')
    y1 = lax.conv_general_dilated(x, w1_hwio, (1, 1), 'SAME',
                                  dimension_numbers=dn) + cb1
    y1 = (y1 - m1) / jnp.sqrt(v1 + eps) * g1 + be1
    y1 = jnp.maximum(y1, 0.0)
    y2 = lax.conv_general_dilated(y1, w2_hwio, (1, 1), 'SAME',
                                  dimension_numbers=dn) + cb2
    y2 = (y2 - m2) / jnp.sqrt(v2 + eps) * g2 + be2
    out = jnp.maximum(y2 + x, 0.0)
    return jnp.transpose(out, (0, 3, 1, 2))


if __name__ == "__main__":
    C = FILTERS
    N, H, W = 2, 16, 16
    eps = 1e-5

    key = jax.random.PRNGKey(0)
    ks = jax.random.split(key, 13)

    # Conv weights (PyTorch OIHW) and biases, deterministic init.
    w1_oihw = 0.1 * jax.random.normal(ks[0], (C, C, 3, 3), jnp.float32)
    cb1 = 0.1 * jax.random.normal(ks[1], (C,), jnp.float32)
    w2_oihw = 0.1 * jax.random.normal(ks[2], (C, C, 3, 3), jnp.float32)
    cb2 = 0.1 * jax.random.normal(ks[3], (C,), jnp.float32)

    # BatchNorm (eval mode) parameters and running stats.
    g1 = 1.0 + 0.1 * jax.random.normal(ks[4], (C,), jnp.float32)
    be1 = 0.1 * jax.random.normal(ks[5], (C,), jnp.float32)
    m1 = 0.1 * jax.random.normal(ks[6], (C,), jnp.float32)
    v1 = 0.5 + jnp.abs(jax.random.normal(ks[7], (C,), jnp.float32))
    g2 = 1.0 + 0.1 * jax.random.normal(ks[8], (C,), jnp.float32)
    be2 = 0.1 * jax.random.normal(ks[9], (C,), jnp.float32)
    m2 = 0.1 * jax.random.normal(ks[10], (C,), jnp.float32)
    v2 = 0.5 + jnp.abs(jax.random.normal(ks[11], (C,), jnp.float32))

    x = jax.random.normal(ks[12], (N, C, H, W), jnp.float32)

    # Fold conv bias + BN into the weights / a per-channel bias (host-side).
    w1_mat, b1_col = fold_conv_bn(w1_oihw, cb1, g1, be1, m1, v1, eps)
    w2_mat, b2_col = fold_conv_bn(w2_oihw, cb2, g2, be2, m2, v2, eps)

    out = basic_block_pallas(x, w1_mat, b1_col, w2_mat, b2_col)
    out = jax.block_until_ready(out)

    # Validate against a plain-JAX reference of the original (unfolded) math.
    w1_hwio = jnp.transpose(w1_oihw, (2, 3, 1, 0))
    w2_hwio = jnp.transpose(w2_oihw, (2, 3, 1, 0))
    ref = _reference(x, w1_hwio, cb1, g1, be1, m1, v1,
                     w2_hwio, cb2, g2, be2, m2, v2, eps)
    assert out.shape == (N, C, H, W)
    assert jnp.allclose(out, ref, rtol=1e-3, atol=1e-3), "mismatch vs reference"

    print("KERNEL_OK")
</pallas_src>

<mosaic_0001>
module attributes {stable_mosaic.version = 11 : i64} {
  func.func @_basic_block_kernel(%arg0: i32, %arg1: memref<1x16x256xf32, #tpu.memory_space<vmem>>, %arg2: memref<16x144xf32, #tpu.memory_space<vmem>>, %arg3: memref<16x1xf32, #tpu.memory_space<vmem>>, %arg4: memref<16x144xf32, #tpu.memory_space<vmem>>, %arg5: memref<16x1xf32, #tpu.memory_space<vmem>>, %arg6: memref<1x16x256xf32, #tpu.memory_space<vmem>>) attributes {dimension_semantics = [#tpu.dimension_semantics<parallel>], iteration_bounds = array<i64: 2>, scalar_prefetch = 0 : i64, scratch_operands = 0 : i64, tpu.core_type = #tpu.core_type<tc>, window_params = [{transform_indices = @transform_0, window_bounds = array<i64: 1, 16, 256>}, {pipeline_mode = #tpu.pipeline_mode<synchronous>, transform_indices = @transform_1, window_bounds = array<i64: 16, 144>}, {pipeline_mode = #tpu.pipeline_mode<synchronous>, transform_indices = @transform_2, window_bounds = array<i64: 16, 1>}, {pipeline_mode = #tpu.pipeline_mode<synchronous>, transform_indices = @transform_3, window_bounds = array<i64: 16, 144>}, {pipeline_mode = #tpu.pipeline_mode<synchronous>, transform_indices = @transform_4, window_bounds = array<i64: 16, 1>}, {transform_indices = @transform_5, window_bounds = array<i64: 1, 16, 256>}]} {
    %c0 = arith.constant 0 : index
    %c0_0 = arith.constant 0 : index
    %c0_1 = arith.constant 0 : index
    %0 = vector.load %arg1[%c0, %c0_0, %c0_1] : memref<1x16x256xf32, #tpu.memory_space<vmem>>, vector<1x16x256xf32>
    %1 = vector.shape_cast %0 : vector<1x16x256xf32> to vector<16x256xf32>
    %2 = tpu.iota {dimensions = array<i32: 1>} : vector<16x256xi32>
    %c16_i32 = arith.constant 16 : i32
    %c0_i32 = arith.constant 0 : i32
    %3 = arith.cmpi eq, %c16_i32, %c0_i32 : i32
    %c1_i32 = arith.constant 1 : i32
    %4 = arith.select %3, %c1_i32, %c16_i32 : i32
    %5 = vector.broadcast %4 : i32 to vector<16x256xi32>
    %6 = arith.remsi %2, %5 : vector<16x256xi32>
    %c0_i32_2 = arith.constant 0 : i32
    %7 = vector.broadcast %c0_i32_2 : i32 to vector<16x256xi32>
    %8 = arith.cmpi ne, %6, %7 : vector<16x256xi32>
    %c0_i32_3 = arith.constant 0 : i32
    %9 = vector.broadcast %c0_i32_3 : i32 to vector<16x256xi32>
    %10 = arith.cmpi slt, %6, %9 : vector<16x256xi32>
    %c0_i32_4 = arith.constant 0 : i32
    %11 = arith.cmpi slt, %4, %c0_i32_4 : i32
    %12 = vector.broadcast %11 : i1 to vector<16x256xi1>
    %13 = vector.broadcast %12 : vector<16x256xi1> to vector<16x256xi1>
    %14 = arith.xori %10, %13 : vector<16x256xi1>
    %15 = arith.andi %14, %8 : vector<16x256xi1>
    %16 = vector.broadcast %4 : i32 to vector<16x256xi32>
    %17 = arith.addi %6, %16 : vector<16x256xi32>
    %18 = arith.select %15, %17, %6 : vector<16x256xi1>, vector<16x256xi32>
    %c1_i32_5 = arith.constant 1 : i32
    %19 = vector.broadcast %c1_i32_5 : i32 to vector<16x256xi32>
    %20 = arith.cmpi sge, %18, %19 : vector<16x256xi32>
    %c15_i32 = arith.constant 15 : i32
    %21 = vector.broadcast %c15_i32 : i32 to vector<16x256xi32>
    %22 = arith.cmpi slt, %18, %21 : vector<16x256xi32>
    %cst = arith.constant 0.000000e+00 : f32
    %23 = vector.broadcast %cst : f32 to vector<16x17xf32>
    %c0_6 = arith.constant 0 : index
    %c0_7 = arith.constant 0 : index
    %24 = vector.load %arg2[%c0_6, %c0_7] : memref<16x144xf32, #tpu.memory_space<vmem>>, vector<16x144xf32>
    %25 = tpu.concatenate %23, %1, %23 in 1 : vector<16x17xf32>, vector<16x256xf32>, vector<16x17xf32> -> vector<16x290xf32>
    %26 = vector.extract_strided_slice %25 {offsets = [0, 0], sizes = [16, 256], strides = [1, 1]} : vector<16x290xf32> to vector<16x256xf32>
    %cst_8 = arith.constant 0.000000e+00 : f32
    %27 = vector.broadcast %cst_8 : f32 to vector<16x256xf32>
    %28 = arith.select %20, %26, %27 : vector<16x256xi1>, vector<16x256xf32>
    %29 = vector.extract_strided_slice %25 {offsets = [0, 1], sizes = [16, 256], strides = [1, 1]} : vector<16x290xf32> to vector<16x256xf32>
    %30 = vector.extract_strided_slice %25 {offsets = [0, 2], sizes = [16, 256], strides = [1, 1]} : vector<16x290xf32> to vector<16x256xf32>
    %cst_9 = arith.constant 0.000000e+00 : f32
    %31 = vector.broadcast %cst_9 : f32 to vector<16x256xf32>
    %32 = arith.select %22, %30, %31 : vector<16x256xi1>, vector<16x256xf32>
    %33 = vector.extract_strided_slice %25 {offsets = [0, 16], sizes = [16, 256], strides = [1, 1]} : vector<16x290xf32> to vector<16x256xf32>
    %cst_10 = arith.constant 0.000000e+00 : f32
    %34 = vector.broadcast %cst_10 : f32 to vector<16x256xf32>
    %35 = arith.select %20, %33, %34 : vector<16x256xi1>, vector<16x256xf32>
    %36 = vector.extract_strided_slice %25 {offsets = [0, 17], sizes = [16, 256], strides = [1, 1]} : vector<16x290xf32> to vector<16x256xf32>
    %37 = vector.extract_strided_slice %25 {offsets = [0, 18], sizes = [16, 256], strides = [1, 1]} : vector<16x290xf32> to vector<16x256xf32>
    %cst_11 = arith.constant 0.000000e+00 : f32
    %38 = vector.broadcast %cst_11 : f32 to vector<16x256xf32>
    %39 = arith.select %22, %37, %38 : vector<16x256xi1>, vector<16x256xf32>
    %40 = vector.extract_strided_slice %25 {offsets = [0, 32], sizes = [16, 256], strides = [1, 1]} : vector<16x290xf32> to vector<16x256xf32>
    %cst_12 = arith.constant 0.000000e+00 : f32
    %41 = vector.broadcast %cst_12 : f32 to vector<16x256xf32>
    %42 = arith.select %20, %40, %41 : vector<16x256xi1>, vector<16x256xf32>
    %43 = vector.extract_strided_slice %25 {offsets = [0, 33], sizes = [16, 256], strides = [1, 1]} : vector<16x290xf32> to vector<16x256xf32>
    %44 = vector.extract_strided_slice %25 {offsets = [0, 34], sizes = [16, 256], strides = [1, 1]} : vector<16x290xf32> to vector<16x256xf32>
    %cst_13 = arith.constant 0.000000e+00 : f32
    %45 = vector.broadcast %cst_13 : f32 to vector<16x256xf32>
    %46 = arith.select %22, %44, %45 : vector<16x256xi1>, vector<16x256xf32>
    %47 = tpu.concatenate %28, %29, %32, %35, %36, %39, %42, %43, %46 in 0 : vector<16x256xf32>, vector<16x256xf32>, vector<16x256xf32>, vector<16x256xf32>, vector<16x256xf32>, vector<16x256xf32>, vector<16x256xf32>, vector<16x256xf32>, vector<16x256xf32> -> vector<144x256xf32>
    %cst_14 = arith.constant dense<0.000000e+00> : vector<16x256xf32>
    %48 = tpu.matmul %24, %47, %cst_14 {dimension_numbers = #tpu.dot_dimension_numbers<[1], [0], [0], [1], [0, 0, 1, 1], [], []>} : vector<16x144xf32>, vector<144x256xf32>, vector<16x256xf32> -> vector<16x256xf32>
    %c0_15 = arith.constant 0 : index
    %c0_16 = arith.constant 0 : index
    %49 = vector.load %arg3[%c0_15, %c0_16] : memref<16x1xf32, #tpu.memory_space<vmem>>, vector<16x1xf32>
    %50 = vector.broadcast %49 : vector<16x1xf32> to vector<16x256xf32>
    %51 = arith.addf %48, %50 : vector<16x256xf32>
    %cst_17 = arith.constant 0.000000e+00 : f32
    %52 = vector.broadcast %cst_17 : f32 to vector<16x256xf32>
    %53 = arith.maximumf %51, %52 : vector<16x256xf32>
    %c0_18 = arith.constant 0 : index
    %c0_19 = arith.constant 0 : index
    %54 = vector.load %arg4[%c0_18, %c0_19] : memref<16x144xf32, #tpu.memory_space<vmem>>, vector<16x144xf32>
    %55 = tpu.concatenate %23, %53, %23 in 1 : vector<16x17xf32>, vector<16x256xf32>, vector<16x17xf32> -> vector<16x290xf32>
    %56 = vector.extract_strided_slice %55 {offsets = [0, 0], sizes = [16, 256], strides = [1, 1]} : vector<16x290xf32> to vector<16x256xf32>
    %cst_20 = arith.constant 0.000000e+00 : f32
    %57 = vector.broadcast %cst_20 : f32 to vector<16x256xf32>
    %58 = arith.select %20, %56, %57 : vector<16x256xi1>, vector<16x256xf32>
    %59 = vector.extract_strided_slice %55 {offsets = [0, 1], sizes = [16, 256], strides = [1, 1]} : vector<16x290xf32> to vector<16x256xf32>
    %60 = vector.extract_strided_slice %55 {offsets = [0, 2], sizes = [16, 256], strides = [1, 1]} : vector<16x290xf32> to vector<16x256xf32>
    %cst_21 = arith.constant 0.000000e+00 : f32
    %61 = vector.broadcast %cst_21 : f32 to vector<16x256xf32>
    %62 = arith.select %22, %60, %61 : vector<16x256xi1>, vector<16x256xf32>
    %63 = vector.extract_strided_slice %55 {offsets = [0, 16], sizes = [16, 256], strides = [1, 1]} : vector<16x290xf32> to vector<16x256xf32>
    %cst_22 = arith.constant 0.000000e+00 : f32
    %64 = vector.broadcast %cst_22 : f32 to vector<16x256xf32>
    %65 = arith.select %20, %63, %64 : vector<16x256xi1>, vector<16x256xf32>
    %66 = vector.extract_strided_slice %55 {offsets = [0, 17], sizes = [16, 256], strides = [1, 1]} : vector<16x290xf32> to vector<16x256xf32>
    %67 = vector.extract_strided_slice %55 {offsets = [0, 18], sizes = [16, 256], strides = [1, 1]} : vector<16x290xf32> to vector<16x256xf32>
    %cst_23 = arith.constant 0.000000e+00 : f32
    %68 = vector.broadcast %cst_23 : f32 to vector<16x256xf32>
    %69 = arith.select %22, %67, %68 : vector<16x256xi1>, vector<16x256xf32>
    %70 = vector.extract_strided_slice %55 {offsets = [0, 32], sizes = [16, 256], strides = [1, 1]} : vector<16x290xf32> to vector<16x256xf32>
    %cst_24 = arith.constant 0.000000e+00 : f32
    %71 = vector.broadcast %cst_24 : f32 to vector<16x256xf32>
    %72 = arith.select %20, %70, %71 : vector<16x256xi1>, vector<16x256xf32>
    %73 = vector.extract_strided_slice %55 {offsets = [0, 33], sizes = [16, 256], strides = [1, 1]} : vector<16x290xf32> to vector<16x256xf32>
    %74 = vector.extract_strided_slice %55 {offsets = [0, 34], sizes = [16, 256], strides = [1, 1]} : vector<16x290xf32> to vector<16x256xf32>
    %cst_25 = arith.constant 0.000000e+00 : f32
    %75 = vector.broadcast %cst_25 : f32 to vector<16x256xf32>
    %76 = arith.select %22, %74, %75 : vector<16x256xi1>, vector<16x256xf32>
    %77 = tpu.concatenate %58, %59, %62, %65, %66, %69, %72, %73, %76 in 0 : vector<16x256xf32>, vector<16x256xf32>, vector<16x256xf32>, vector<16x256xf32>, vector<16x256xf32>, vector<16x256xf32>, vector<16x256xf32>, vector<16x256xf32>, vector<16x256xf32> -> vector<144x256xf32>
    %cst_26 = arith.constant dense<0.000000e+00> : vector<16x256xf32>
    %78 = tpu.matmul %54, %77, %cst_26 {dimension_numbers = #tpu.dot_dimension_numbers<[1], [0], [0], [1], [0, 0, 1, 1], [], []>} : vector<16x144xf32>, vector<144x256xf32>, vector<16x256xf32> -> vector<16x256xf32>
    %c0_27 = arith.constant 0 : index
    %c0_28 = arith.constant 0 : index
    %79 = vector.load %arg5[%c0_27, %c0_28] : memref<16x1xf32, #tpu.memory_space<vmem>>, vector<16x1xf32>
    %80 = vector.broadcast %79 : vector<16x1xf32> to vector<16x256xf32>
    %81 = arith.addf %78, %80 : vector<16x256xf32>
    %82 = arith.addf %81, %1 : vector<16x256xf32>
    %cst_29 = arith.constant 0.000000e+00 : f32
    %83 = vector.broadcast %cst_29 : f32 to vector<16x256xf32>
    %84 = arith.maximumf %82, %83 : vector<16x256xf32>
    %c0_30 = arith.constant 0 : index
    %c0_31 = arith.constant 0 : index
    %c0_32 = arith.constant 0 : index
    %85 = vector.load %arg6[%c0_30, %c0_31, %c0_32] : memref<1x16x256xf32, #tpu.memory_space<vmem>>, vector<1x16x256xf32>
    %86 = vector.shape_cast %85 : vector<1x16x256xf32> to vector<16x256xf32>
    %87 = vector.shape_cast %84 : vector<16x256xf32> to vector<1x16x256xf32>
    tpu.vector_store %arg6[%c0_30, %c0_31, %c0_32], %87 {strides = array<i32>} : memref<1x16x256xf32, #tpu.memory_space<vmem>>, vector<1x16x256xf32>,
    return
  }
  func.func @transform_0(%arg0: i32) -> (i32, i32, i32) {
    %c0_i32 = arith.constant 0 : i32
    %c0_i32_0 = arith.constant 0 : i32
    %c0_i32_1 = arith.constant 0 : i32
    return %arg0, %c0_i32, %c0_i32_0 : i32, i32, i32
  }
  func.func @transform_1(%arg0: i32) -> (i32, i32) {
    %c0_i32 = arith.constant 0 : i32
    %c0_i32_0 = arith.constant 0 : i32
    %c0_i32_1 = arith.constant 0 : i32
    return %c0_i32, %c0_i32_0 : i32, i32
  }
  func.func @transform_2(%arg0: i32) -> (i32, i32) {
    %c0_i32 = arith.constant 0 : i32
    %c0_i32_0 = arith.constant 0 : i32
    %c0_i32_1 = arith.constant 0 : i32
    return %c0_i32, %c0_i32_0 : i32, i32
  }
  func.func @transform_3(%arg0: i32) -> (i32, i32) {
    %c0_i32 = arith.constant 0 : i32
    %c0_i32_0 = arith.constant 0 : i32
    %c0_i32_1 = arith.constant 0 : i32
    return %c0_i32, %c0_i32_0 : i32, i32
  }
  func.func @transform_4(%arg0: i32) -> (i32, i32) {
    %c0_i32 = arith.constant 0 : i32
    %c0_i32_0 = arith.constant 0 : i32
    %c0_i32_1 = arith.constant 0 : i32
    return %c0_i32, %c0_i32_0 : i32, i32
  }
  func.func @transform_5(%arg0: i32) -> (i32, i32, i32) {
    %c0_i32 = arith.constant 0 : i32
    %c0_i32_0 = arith.constant 0 : i32
    %c0_i32_1 = arith.constant 0 : i32
    return %arg0, %c0_i32, %c0_i32_0 : i32, i32, i32
  }
}

</mosaic_0001>

<llo_original>
// kernel: tpu_custom_call.1
$region0: #{tpu_custom_call.1}
  #allocation0 [shape = 'u32[]', space=smem, size = 0x4, offset = 0x4, fixed_abs, tag = 'smem constant byte address 0x4 - core index']
  #allocation1 [shape = 'u32[144,128]{1,0:T(1,128)}', space=vmem, size = 0x12000, scoped, tag = 'internal scratch']
  %s0 = inlined_call_operand.hbm [shape: f32[2,16,256], index: 0, kind: input, shape index: {}]
  %s1 = inlined_call_operand.vmem [shape: f32[16,144], index: 1, kind: input, shape index: {}]
  %s2 = inlined_call_operand.vmem [shape: f32[16,1], index: 2, kind: input, shape index: {}]
  %s3 = inlined_call_operand.hbm [shape: f32[16,144], index: 3, kind: input, shape index: {}]
  %s4 = inlined_call_operand.vmem [shape: f32[16,1], index: 4, kind: input, shape index: {}]
  %s5 = inlined_call_operand.hbm [shape: f32[2,16,256], index: 5, kind: output, shape index: {}]
  %s6 = sld [smem:[#allocation0]]
  $region61: #{tpu_custom_call.1} parent=0
    _
  %s8 = ssub.s32 1, %s6
  %s9 = scalar_select 0, %s8, %s6
  $region1: #{tpu_custom_call.1} parent=0
    #allocation2 [shape = 'u8[32768]{0}', space=vmem, size = 0x8000, scoped, tag = 'input window, operand 0']
    #allocation3 [shape = 's32[2]{0}', space=sflag, size = 0x8, scoped, tag = 'scoped memory for tpu_custom_call.1']
    #allocation4 [shape = 's32[2]{0}', space=sflag, size = 0x8, scoped, tag = 'scoped memory for tpu_custom_call.1']
    #allocation5 [shape = 'u8[16384]{0}', space=vmem, size = 0x4000, scoped, tag = 'input window, operand 3, single buffered']
    #allocation6 [shape = 's32[1]{0}', space=sflag, size = 0x4, scoped, tag = 'scoped memory for tpu_custom_call.1']
    #allocation7 [shape = 'u8[32768]{0}', space=vmem, size = 0x8000, scoped, tag = 'output window, operand 0']
    %10 = vsyncpa [#allocation3], 0
    %s11 = scalar_lea.sflag [#allocation3], 1
    %12 = vsyncpa %s11, 0
    %13 = vsyncpa [#allocation6], 0
    %14 = vsyncpa [#allocation4], 0
    %s15 = scalar_lea.sflag [#allocation4], 1
    %16 = vsyncpa %s15, 0
    loop: start=0, step=1, limit=4
    $region2: #{tpu_custom_call.1} parent=1 // loop_pre_header
      _
    $region3: #{tpu_custom_call.1} parent=1 // loop_header
      %s18 = sphi 0, %s22
      %p19 = scmp.ge.s32.totalorder %s18, 4
      %s28 = sphi 0, %s30
      %s31 = sphi 0, %s28
      %s32 = sphi 0, %s31
      %s48 = sphi 0, %s32
      %s52 = sphi 0, %s52
      %s54 = sphi 0, %s52
      %s55 = sphi 0, %s54
      %s69 = sphi 0, %s55
      %s73 = sphi 0, %s73
      %s75 = sphi 0, %s73
      %s76 = sphi 0, %s75
      %s90 = sphi 0, %s76
      %s94 = sphi 0, %s94
      %s96 = sphi 0, %s94
      %s97 = sphi 0, %s96
      %s111 = sphi 0, %s97
      %s115 = sphi 0, %s115
      %s117 = sphi 0, %s115
      %s118 = sphi 0, %s117
      %s132 = sphi 0, %s118
      %s138 = sphi 0, %s140
      %s141 = sphi 0, %s138
      %s142 = sphi 0, %s141
      %s158 = sphi 0, %s142
    $region4: #{tpu_custom_call.1} parent=1 // loop_header_branch
      %21 = sbr.rel (%p19) target = $region8
    $region5: #{tpu_custom_call.1} parent=1 // loop_body
      %s23 = ssub.s32 %s18, 1
      %s24 = ssub.s32 %s18, 2
      %s25 = sadd.s32 %s18, 1
      %s26 = ssub.s32 %s18, %s25
      %p27 = scmp.eq.s32.totalorder %s26, 0
      %s29 = sadd.s32 %s28, 1
      %s30 = scalar_select %p27, %s28, %s29
      %p33 = pneg %p27
      %p34 = scmp.eq.s32.totalorder %s18, 1
      %p35 = por %p33, %p34
      %p36 = scmp.ne.s32.totalorder %s28, %s31
      %p37 = scmp.eq.s32.totalorder %s18, 0
      %p38 = por %p36, %p37
      %p39 = scmp.ne.s32.totalorder %s28, %s31
      %p40 = scmp.eq.s32.totalorder %s23, 1
      %p41 = por %p39, %p40
      %p42 = scmp.ne.s32.totalorder %s31, %s32
      %p43 = scmp.eq.s32.totalorder %s23, 0
      %p44 = por %p42, %p43
      %p45 = scmp.ne.s32.totalorder %s31, %s32
      %p46 = scmp.eq.s32.totalorder %s24, 1
      %p47 = por %p45, %p46
      %p49 = scmp.ne.s32.totalorder %s32, %s48
      %p50 = scmp.eq.s32.totalorder %s24, 0
      %p51 = por %p49, %p50
      %s53 = sadd.s32 %s52, 1
      %p56 = scmp.eq.s32.totalorder %s18, 1
      %p57 = scmp.ne.s32.totalorder %s52, %s54
      %p58 = scmp.eq.s32.totalorder %s18, 0
      %p59 = por %p57, %p58
      %p60 = scmp.ne.s32.totalorder %s52, %s54
      %p61 = scmp.eq.s32.totalorder %s23, 1
      %p62 = por %p60, %p61
      %p63 = scmp.ne.s32.totalorder %s54, %s55
      %p64 = scmp.eq.s32.totalorder %s23, 0
      %p65 = por %p63, %p64
      %p66 = scmp.ne.s32.totalorder %s54, %s55
      %p67 = scmp.eq.s32.totalorder %s24, 1
      %p68 = por %p66, %p67
      %p70 = scmp.ne.s32.totalorder %s55, %s69
      %p71 = scmp.eq.s32.totalorder %s24, 0
      %p72 = por %p70, %p71
      %s74 = sadd.s32 %s73, 1
      %p77 = scmp.eq.s32.totalorder %s18, 1
      %p78 = scmp.ne.s32.totalorder %s73, %s75
      %p79 = scmp.eq.s32.totalorder %s18, 0
      %p80 = por %p78, %p79
      %p81 = scmp.ne.s32.totalorder %s73, %s75
      %p82 = scmp.eq.s32.totalorder %s23, 1
      %p83 = por %p81, %p82
      %p84 = scmp.ne.s32.totalorder %s75, %s76
      %p85 = scmp.eq.s32.totalorder %s23, 0
      %p86 = por %p84, %p85
      %p87 = scmp.ne.s32.totalorder %s75, %s76
      %p88 = scmp.eq.s32.totalorder %s24, 1
      %p89 = por %p87, %p88
      %p91 = scmp.ne.s32.totalorder %s76, %s90
      %p92 = scmp.eq.s32.totalorder %s24, 0
      %p93 = por %p91, %p92
      %s95 = sadd.s32 %s94, 1
      %p98 = scmp.eq.s32.totalorder %s18, 1
      %p99 = scmp.ne.s32.totalorder %s94, %s96
      %p100 = scmp.eq.s32.totalorder %s18, 0
      %p101 = por %p99, %p100
      %p102 = scmp.ne.s32.totalorder %s94, %s96
      %p103 = scmp.eq.s32.totalorder %s23, 1
      %p104 = por %p102, %p103
      %p105 = scmp.ne.s32.totalorder %s96, %s97
      %p106 = scmp.eq.s32.totalorder %s23, 0
      %p107 = por %p105, %p106
      %p108 = scmp.ne.s32.totalorder %s96, %s97
      %p109 = scmp.eq.s32.totalorder %s24, 1
      %p110 = por %p108, %p109
      %p112 = scmp.ne.s32.totalorder %s97, %s111
      %p113 = scmp.eq.s32.totalorder %s24, 0
      %p114 = por %p112, %p113
      %s116 = sadd.s32 %s115, 1
      %p119 = scmp.eq.s32.totalorder %s18, 1
      %p120 = scmp.ne.s32.totalorder %s115, %s117
      %p121 = scmp.eq.s32.totalorder %s18, 0
      %p122 = por %p120, %p121
      %p123 = scmp.ne.s32.totalorder %s115, %s117
      %p124 = scmp.eq.s32.totalorder %s23, 1
      %p125 = por %p123, %p124
      %p126 = scmp.ne.s32.totalorder %s117, %s118
      %p127 = scmp.eq.s32.totalorder %s23, 0
      %p128 = por %p126, %p127
      %p129 = scmp.ne.s32.totalorder %s117, %s118
      %p130 = scmp.eq.s32.totalorder %s24, 1
      %p131 = por %p129, %p130
      %p133 = scmp.ne.s32.totalorder %s118, %s132
      %p134 = scmp.eq.s32.totalorder %s24, 0
      %p135 = por %p133, %p134
      %s136 = ssub.s32 %s18, %s25
      %p137 = scmp.eq.s32.totalorder %s136, 0
      %s139 = sadd.s32 %s138, 1
      %s140 = scalar_select %p137, %s138, %s139
      %p143 = pneg %p137
      %p144 = scmp.eq.s32.totalorder %s18, 1
      %p145 = por %p143, %p144
      %p146 = scmp.ne.s32.totalorder %s138, %s141
      %p147 = scmp.eq.s32.totalorder %s18, 0
      %p148 = por %p146, %p147
      %p149 = scmp.ne.s32.totalorder %s138, %s141
      %p150 = scmp.eq.s32.totalorder %s23, 1
      %p151 = por %p149, %p150
      %p152 = scmp.ne.s32.totalorder %s141, %s142
      %p153 = scmp.eq.s32.totalorder %s23, 0
      %p154 = por %p152, %p153
      %p155 = scmp.ne.s32.totalorder %s141, %s142
      %p156 = scmp.eq.s32.totalorder %s24, 1
      %p157 = por %p155, %p156
      %p159 = scmp.ne.s32.totalorder %s142, %s158
      %p160 = scmp.eq.s32.totalorder %s24, 0
      %p161 = por %p159, %p160
      %p162 = scmp.le.s32.totalorder 1, %s18
      %p163 = scmp.lt.s32.totalorder %s18, 3
      %p164 = pnand %p162, %p163
      %p165 = pneg %p164
      // Predicated region
      $region9: #{tpu_custom_call.1} parent=5 // pred_check
        _
      $region10: #{tpu_custom_call.1} parent=5 // pred_check_branch
        %167 = sbr.rel (%p164) target = $region12
      $region11: #{tpu_custom_call.1} parent=5 // pred_region
        %s168 = ssub.s32 %s18, 1
        // Predicated region
        $region13: #{tpu_custom_call.1} parent=11 // pred_check
          %p169 = pneg %p65
        $region14: #{tpu_custom_call.1} parent=11 // pred_check_branch
          %171 = sbr.rel (%p169) target = $region16
        $region15: #{tpu_custom_call.1} parent=11 // pred_region
          _
        $region16: #{tpu_custom_call.1} parent=11 // pred_fallthru
          _
        // Predicated region
        $region17: #{tpu_custom_call.1} parent=11 // pred_check
          %p172 = pneg %p86
        $region18: #{tpu_custom_call.1} parent=11 // pred_check_branch
          %174 = sbr.rel (%p172) target = $region20
        $region19: #{tpu_custom_call.1} parent=11 // pred_region
          _
        $region20: #{tpu_custom_call.1} parent=11 // pred_fallthru
          _
        // Predicated region
        $region21: #{tpu_custom_call.1} parent=11 // pred_check
          %p175 = pneg %p107
        $region22: #{tpu_custom_call.1} parent=11 // pred_check_branch
          %177 = sbr.rel (%p175) target = $region24
        $region23: #{tpu_custom_call.1} parent=11 // pred_region
          %s179 = ssub.s32 512, 512
          %180 = vsyncadd [#allocation6], %s179
          %s181 = sshll.u32 [#allocation5], 4
          %s182 = int_to_ptr.vmem [resolvable:$true] %s181
          %187 = dma.hbm_to_vmem [thread:$0]  %s3, 512, %s182, [#allocation6], 256, 256, 16
        $region24: #{tpu_custom_call.1} parent=11 // pred_fallthru
          _
        // Predicated region
        $region25: #{tpu_custom_call.1} parent=11 // pred_check
          %p188 = pneg %p128
        $region26: #{tpu_custom_call.1} parent=11 // pred_check_branch
          %190 = sbr.rel (%p188) target = $region28
        $region27: #{tpu_custom_call.1} parent=11 // pred_region
          _
        $region28: #{tpu_custom_call.1} parent=11 // pred_fallthru
          _
      $region12: #{tpu_custom_call.1} parent=5 // pred_fallthru
        _
      %p191 = scmp.lt.s32.totalorder %s18, 2
      // Predicated region
      $region29: #{tpu_custom_call.1} parent=5 // pred_check
        %p192 = pneg %p191
      $region30: #{tpu_custom_call.1} parent=5 // pred_check_branch
        %194 = sbr.rel (%p192) target = $region32
      $region31: #{tpu_custom_call.1} parent=5 // pred_region
        // Predicated region
        $region33: #{tpu_custom_call.1} parent=31 // pred_check
          %p195 = pneg %p38
        $region34: #{tpu_custom_call.1} parent=31 // pred_check_branch
          %197 = sbr.rel (%p195) target = $region36
        $region35: #{tpu_custom_call.1} parent=31 // pred_region
          %s198 = sand.u32 %s28, 1
          %s199 = scalar_lea.sflag [#allocation3], %s198
          %s200 = sand.u32 %s28, 1
          %s201 = smul.addr %s200, 32
          %s202 = scalar_lea.vmem [#allocation2], %s201
          %s204 = ssub.s32 512, 512
          %205 = vsyncadd %s199, %s204
          %s206 = smul.addr %s18, 4
          %s207 = smul.addr %s206, 128
          %s208 = scalar_lea.hbm %s0, %s207
          %s209 = sshll.u32 %s202, 4
          %s210 = int_to_ptr.vmem [resolvable:$true] %s209
          %215 = dma.hbm_to_vmem [thread:$0]  %s208, 512, %s210, %s199, 256, 256, 16
        $region36: #{tpu_custom_call.1} parent=31 // pred_fallthru
          _
      $region32: #{tpu_custom_call.1} parent=5 // pred_fallthru
        _
      %p216 = scmp.le.s32.totalorder 1, %s18
      %p217 = scmp.lt.s32.totalorder %s18, 3
      %p218 = pnand %p216, %p217
      %p219 = pneg %p218
      // Predicated region
      $region37: #{tpu_custom_call.1} parent=5 // pred_check
        _
      $region38: #{tpu_custom_call.1} parent=5 // pred_check_branch
        %221 = sbr.rel (%p218) target = $region40
      $region39: #{tpu_custom_call.1} parent=5 // pred_region
        %s222 = ssub.s32 %s18, 1
        %s223 = sand.u32 %s31, 1
        %s224 = scalar_lea.sflag [#allocation3], %s223
        %s225 = sand.u32 %s31, 1
        %s226 = smul.addr %s225, 32
        %s227 = scalar_lea.vmem [#allocation2], %s226
        // Predicated region
        $region41: #{tpu_custom_call.1} parent=39 // pred_check
          %p228 = pneg %p44
        $region42: #{tpu_custom_call.1} parent=39 // pred_check_branch
          %230 = sbr.rel (%p228) target = $region44
        $region43: #{tpu_custom_call.1} parent=39 // pred_region
          %231 = dma.done %s224, 512
        $region44: #{tpu_custom_call.1} parent=39 // pred_fallthru
          _
        // Predicated region
        $region45: #{tpu_custom_call.1} parent=39 // pred_check
          %p232 = pneg %p107
        $region46: #{tpu_custom_call.1} parent=39 // pred_check_branch
          %234 = sbr.rel (%p232) target = $region48
        $region47: #{tpu_custom_call.1} parent=39 // pred_region
          %235 = dma.done [#allocation6], 512
        $region48: #{tpu_custom_call.1} parent=39 // pred_fallthru
          _
        %s236 = sand.u32 %s31, 1
        %s237 = scalar_lea.sflag [#allocation3], %s236
        %s238 = sand.u32 %s31, 1
        %s239 = smul.addr %s238, 32
        %s240 = scalar_lea.vmem [#allocation2], %s239
        %p241 = pneg %p44
        %p242 = pneg %p41
        %p243 = pneg %p65
        %p244 = pneg %p62
        %p245 = pneg %p86
        %p246 = pneg %p83
        %p247 = pneg %p107
        %p248 = pneg %p104
        %p249 = pneg %p128
        %p250 = pneg %p125
        %p251 = pneg %p154
        %p252 = pneg %p151
        %s253 = sand.u32 %s141, 1
        %s254 = scalar_lea.sflag [#allocation4], %s253
        %s255 = sand.u32 %s141, 1
        %s256 = smul.addr %s255, 32
        %s257 = scalar_lea.vmem [#allocation7], %s256
        %v258 = vld [vmem:[%s227] sm:$0xff]
        %v259 = vld [vmem:[%s227 + $0x8] sm:$0xff]
        %v260 = vld [vmem:[%s227 + $0x10] sm:$0xff]
        %v261 = vld [vmem:[%s227 + $0x18] sm:$0xff]
        %v262 = vlaneseq
        %v263 = vand.u32 %v262, 127
        %v264 = vadd.s32 %v263, 128
        %vm265 = vcmp.lt.s32.totalorder %v263, 0
        %v266 = vsub.s32 0, %v263
        %v267 = vsel %vm265, %v266, %v263
        %v268 = vshrl.u32 %v267, 4
        %v269 = vand.u32 %v267, 15
        %v270 = vsub.s32 0, %v269
        %v271 = vsel %vm265, %v270, %v269
        %vm272 = vcmp.lt.s32.totalorder %v264, 0
        %v273 = vsub.s32 0, %v264
        %v274 = vsel %vm272, %v273, %v264
        %v275 = vshrl.u32 %v274, 4
        %v276 = vand.u32 %v274, 15
        %v277 = vsub.s32 0, %v276
        %v278 = vsel %vm272, %v277, %v276
        %vm279 = vcmp.ne.s32.totalorder %v271, 0
        %vm280 = vcmp.ne.s32.totalorder %v278, 0
        %vm281 = vcmp.lt.s32.totalorder %v271, 0
        %vm282 = vcmp.lt.s32.totalorder %v278, 0
        %vm283 = vmand %vm281, %vm279
        %vm284 = vmand %vm282, %vm280
        %v285 = vadd.s32 %v271, 16
        %v286 = vadd.s32 %v278, 16
        %v287 = vsel %vm283, %v285, %v271
        %v288 = vsel %vm284, %v286, %v278
        %vm289 = vcmp.ge.s32.totalorder %v287, 1
        %vm290 = vcmp.ge.s32.totalorder %v288, 1
        %vm291 = vcmp.lt.s32.totalorder %v287, 15
        %vm292 = vcmp.lt.s32.totalorder %v288, 15
        %v293 = vld [vmem:[%s1] sm:$0xff]
        %v294 = vld [vmem:[%s1 + $0x8] sm:$0xff]
        %v295 = vld [vmem:[%s1 + $0x10] sm:$0xff]
        %v296 = vld [vmem:[%s1 + $0x18] sm:$0xff]
        %301 = vrot.lane.b32.xlu0 %v258, 17
        %v302 = vpop.permute.xlu0 %301
        %303 = vrot.lane.b32.xlu0 %v259, 17
        %v304 = vpop.permute.xlu0 %303
        %305 = vrot.lane.b32.xlu0 %v260, 17
        %v306 = vpop.permute.xlu0 %305
        %307 = vrot.lane.b32.xlu0 %v261, 17
        %v308 = vpop.permute.xlu0 %307
        %vm309 = vcmask 138240
        %v310 = vsel %vm309, %v302, %v304
        %v311 = vsel %vm309, %v306, %v308
        %v318 = vsel %vm309, 0.0, %v302
        %v319 = vsel %vm309, 0.0, %v306
        %v320 = vsel %vm309, %v304, 0.0
        %v321 = vsel %vm309, %v308, 0.0
        %v322 = vsel %vm289, %v318, 0.0
        %v323 = vsel %vm290, %v310, 0.0
        %v324 = vsel %vm289, %v319, 0.0
        %v325 = vsel %vm290, %v311, 0.0
        %330 = vrot.lane.b32.xlu0 %v318, 126
        %v331 = vpop.permute.xlu0 %330
        %332 = vrot.lane.b32.xlu0 %v310, 126
        %v333 = vpop.permute.xlu0 %332
        %334 = vrot.lane.b32.xlu0 %v320, 126
        %v335 = vpop.permute.xlu0 %334
        %336 = vrot.lane.b32.xlu0 %v319, 126
        %v337 = vpop.permute.xlu0 %336
        %338 = vrot.lane.b32.xlu0 %v311, 126
        %v339 = vpop.permute.xlu0 %338
        %340 = vrot.lane.b32.xlu0 %v321, 126
        %v341 = vpop.permute.xlu0 %340
        %vm342 = vcmask 1031168
        %v343 = vsel %vm342, %v331, %v333
        %v344 = vsel %vm342, %v333, %v335
        %v345 = vsel %vm342, %v337, %v339
        %v346 = vsel %vm342, %v339, %v341
        %v351 = vsel %vm291, %v343, 0.0
        %v352 = vsel %vm292, %v344, 0.0
        %v353 = vsel %vm291, %v345, 0.0
        %v354 = vsel %vm292, %v346, 0.0
        %355 = vrot.lane.b32.xlu0 %v318, 112
        %v356 = vpop.permute.xlu0 %355
        %357 = vrot.lane.b32.xlu0 %v310, 112
        %v358 = vpop.permute.xlu0 %357
        %359 = vrot.lane.b32.xlu0 %v320, 112
        %v360 = vpop.permute.xlu0 %359
        %361 = vrot.lane.b32.xlu0 %v319, 112
        %v362 = vpop.permute.xlu0 %361
        %363 = vrot.lane.b32.xlu0 %v311, 112
        %v364 = vpop.permute.xlu0 %363
        %365 = vrot.lane.b32.xlu0 %v321, 112
        %v366 = vpop.permute.xlu0 %365
        %vm367 = vcmask 916480
        %v368 = vsel %vm367, %v356, %v358
        %v369 = vsel %vm367, %v358, %v360
        %v370 = vsel %vm367, %v362, %v364
        %v371 = vsel %vm367, %v364, %v366
        %v376 = vsel %vm289, %v368, 0.0
        %v377 = vsel %vm290, %v369, 0.0
        %v378 = vsel %vm289, %v370, 0.0
        %v379 = vsel %vm290, %v371, 0.0
        %380 = vrot.lane.b32.xlu0 %v318, 110
        %v381 = vpop.permute.xlu0 %380
        %382 = vrot.lane.b32.xlu0 %v310, 110
        %v383 = vpop.permute.xlu0 %382
        %384 = vrot.lane.b32.xlu0 %v320, 110
        %v385 = vpop.permute.xlu0 %384
        %386 = vrot.lane.b32.xlu0 %v319, 110
        %v387 = vpop.permute.xlu0 %386
        %388 = vrot.lane.b32.xlu0 %v311, 110
        %v389 = vpop.permute.xlu0 %388
        %390 = vrot.lane.b32.xlu0 %v321, 110
        %v391 = vpop.permute.xlu0 %390
        %vm392 = vcmask 900096
        %v393 = vsel %vm392, %v381, %v383
        %v394 = vsel %vm392, %v383, %v385
        %v395 = vsel %vm392, %v387, %v389
        %v396 = vsel %vm392, %v389, %v391
        %v401 = vsel %vm291, %v393, 0.0
        %v402 = vsel %vm292, %v394, 0.0
        %v403 = vsel %vm291, %v395, 0.0
        %v404 = vsel %vm292, %v396, 0.0
        %405 = vrot.lane.b32.xlu0 %v318, 96
        %v406 = vpop.permute.xlu0 %405
        %407 = vrot.lane.b32.xlu0 %v310, 96
        %v408 = vpop.permute.xlu0 %407
        %409 = vrot.lane.b32.xlu0 %v320, 96
        %v410 = vpop.permute.xlu0 %409
        %411 = vrot.lane.b32.xlu0 %v319, 96
        %v412 = vpop.permute.xlu0 %411
        %413 = vrot.lane.b32.xlu0 %v311, 96
        %v414 = vpop.permute.xlu0 %413
        %415 = vrot.lane.b32.xlu0 %v321, 96
        %v416 = vpop.permute.xlu0 %415
        %vm417 = vcmask 785408
        %v418 = vsel %vm417, %v406, %v408
        %v419 = vsel %vm417, %v408, %v410
        %v420 = vsel %vm417, %v412, %v414
        %v421 = vsel %vm417, %v414, %v416
        %v426 = vsel %vm289, %v418, 0.0
        %v427 = vsel %vm290, %v419, 0.0
        %v428 = vsel %vm289, %v420, 0.0
        %v429 = vsel %vm290, %v421, 0.0
        %430 = vrot.lane.b32.xlu0 %v318, 94
        %v431 = vpop.permute.xlu0 %430
        %432 = vrot.lane.b32.xlu0 %v310, 94
        %v433 = vpop.permute.xlu0 %432
        %434 = vrot.lane.b32.xlu0 %v320, 94
        %v435 = vpop.permute.xlu0 %434
        %436 = vrot.lane.b32.xlu0 %v319, 94
        %v437 = vpop.permute.xlu0 %436
        %438 = vrot.lane.b32.xlu0 %v311, 94
        %v439 = vpop.permute.xlu0 %438
        %440 = vrot.lane.b32.xlu0 %v321, 94
        %v441 = vpop.permute.xlu0 %440
        %vm442 = vcmask 769024
        %v443 = vsel %vm442, %v431, %v433
        %v444 = vsel %vm442, %v433, %v435
        %v445 = vsel %vm442, %v437, %v439
        %v446 = vsel %vm442, %v439, %v441
        %v451 = vsel %vm291, %v443, 0.0
        %v452 = vsel %vm292, %v444, 0.0
        %v453 = vsel %vm291, %v445, 0.0
        %v454 = vsel %vm292, %v446, 0.0
        %455 = vrot.lane.b32.xlu0 %v318, 127
        %v456 = vpop.permute.xlu0 %455
        %457 = vrot.lane.b32.xlu0 %v310, 127
        %v458 = vpop.permute.xlu0 %457
        %459 = vrot.lane.b32.xlu0 %v320, 127
        %v460 = vpop.permute.xlu0 %459
        %461 = vrot.lane.b32.xlu0 %v319, 127
        %v462 = vpop.permute.xlu0 %461
        %463 = vrot.lane.b32.xlu0 %v311, 127
        %v464 = vpop.permute.xlu0 %463
        %465 = vrot.lane.b32.xlu0 %v321, 127
        %v466 = vpop.permute.xlu0 %465
        %vm467 = vcmask 1039360
        %v468 = vsel %vm467, %v456, %v458
        %v469 = vsel %vm467, %v458, %v460
        %v470 = vsel %vm467, %v462, %v464
        %v471 = vsel %vm467, %v464, %v466
        %476 = vrot.lane.b32.xlu0 %v318, 111
        %v477 = vpop.permute.xlu0 %476
        %478 = vrot.lane.b32.xlu0 %v310, 111
        %v479 = vpop.permute.xlu0 %478
        %480 = vrot.lane.b32.xlu0 %v320, 111
        %v481 = vpop.permute.xlu0 %480
        %482 = vrot.lane.b32.xlu0 %v319, 111
        %v483 = vpop.permute.xlu0 %482
        %484 = vrot.lane.b32.xlu0 %v311, 111
        %v485 = vpop.permute.xlu0 %484
        %486 = vrot.lane.b32.xlu0 %v321, 111
        %v487 = vpop.permute.xlu0 %486
        %vm488 = vcmask 908288
        %v489 = vsel %vm488, %v477, %v479
        %v490 = vsel %vm488, %v479, %v481
        %v491 = vsel %vm488, %v483, %v485
        %v492 = vsel %vm488, %v485, %v487
        %497 = vrot.lane.b32.xlu0 %v318, 95
        %v498 = vpop.permute.xlu0 %497
        %499 = vrot.lane.b32.xlu0 %v310, 95
        %v500 = vpop.permute.xlu0 %499
        %501 = vrot.lane.b32.xlu0 %v320, 95
        %v502 = vpop.permute.xlu0 %501
        %503 = vrot.lane.b32.xlu0 %v319, 95
        %v504 = vpop.permute.xlu0 %503
        %505 = vrot.lane.b32.xlu0 %v311, 95
        %v506 = vpop.permute.xlu0 %505
        %507 = vrot.lane.b32.xlu0 %v321, 95
        %v508 = vpop.permute.xlu0 %507
        %vm509 = vcmask 777216
        %v510 = vsel %vm509, %v498, %v500
        %v511 = vsel %vm509, %v500, %v502
        %v512 = vsel %vm509, %v504, %v506
        %v513 = vsel %vm509, %v506, %v508
        %v518 = vld [vmem:[%s2] sm:$0xff]
        %v519 = vld [vmem:[%s2 + $0x8] sm:$0xff]
        %521 = vset.pattern.permute.xlu0 0
        %522 = vperm.xlu0 %521, %v518
        %v523 = vpop.permute.xlu0 %522
        %526 = vset.pattern.permute.xlu0 0
        %527 = vperm.xlu0 %526, %v519
        %v528 = vpop.permute.xlu0 %527
        %vm530 = vcmask 130048
        %v532 = vsel %vm530, %v294, 0
        %v535 = vsel %vm530, %v296, 0
        %537 = vmatprep.subr.mxu0 %v323
        %538 = vmatpush1.msra.mxu0 %v322
        %539 = vmatprep.subr.mxu0 %v325
        %540 = vmatpush1.msra.mxu0 %v324
        %541 = vmatprep.subr.mxu0 %v469
        %542 = vmatpush1.msra.mxu0 %v468
        %543 = vmatprep.subr.mxu0 %v471
        %544 = vmatpush1.msra.mxu0 %v470
        %545 = vmatprep.subr.mxu0 %v352
        %546 = vmatpush1.msra.mxu0 %v351
        %547 = vmatprep.subr.mxu0 %v354
        %548 = vmatpush1.msra.mxu0 %v353
        %549 = vmatprep.subr.mxu0 %v377
        %550 = vmatpush1.msra.mxu0 %v376
        %551 = vmatprep.subr.mxu0 %v379
        %552 = vmatpush1.msra.mxu0 %v378
        %553 = vmatprep.subr.mxu0 %v490
        %554 = vmatpush1.msra.mxu0 %v489
        %555 = vmatprep.subr.mxu0 %v492
        %556 = vmatpush1.msra.mxu0 %v491
        %557 = vmatprep.subr.mxu0 %v402
        %558 = vmatpush1.msra.mxu0 %v401
        %559 = vmatprep.subr.mxu0 %v404
        %560 = vmatpush1.msra.mxu0 %v403
        %561 = vmatprep.subr.mxu0 %v427
        %562 = vmatpush1.msra.mxu0 %v426
        %563 = vmatprep.subr.mxu0 %v429
        %564 = vmatpush1.msra.mxu0 %v428
        %565 = vmatprep.subr.mxu0 %v511
        %566 = vmatpush1.msra.mxu0 %v510
        %567 = vmatprep.subr.mxu0 %v513
        %568 = vmatpush1.msra.mxu0 %v512
        %569 = vmatprep.subr.mxu0 %v452
        %570 = vmatpush1.msra.mxu0 %v451
        %571 = vmatprep.subr.mxu0 %v454
        %572 = vmatpush1.msra.mxu0 %v453
        %573 = vmatprep.subr.mxu0 0.0
        %574 = vmatpush1.msra.mxu0 0.0
        %575 = vmatprep.subr.mxu0 0.0
        %576 = vmatpush1.msra.mxu0 0.0
        %577 = vmatprep.subr.mxu0 0.0
        %578 = vmatpush1.msra.mxu0 0.0
        %579 = vmatprep.subr.mxu0 0.0
        %580 = vmatpush1.msra.mxu0 0.0
        %581 = vmatprep.subr.mxu0 0.0
        %582 = vmatpush1.msra.mxu0 0.0
        %583 = vmatprep.subr.mxu0 0.0
        %584 = vmatpush1.msra.mxu0 0.0
        %585 = vmatprep.subr.mxu0 0.0
        %586 = vmatpush1.msra.mxu0 0.0
        %587 = vmatprep.subr.mxu0 0.0
        %588 = vmatpush1.msra.mxu0 0.0
        %589 = vmatprep.subr.mxu0 0.0
        %590 = vmatpush1.msra.mxu0 0.0
        %591 = vmatprep.subr.mxu0 0.0
        %592 = vmatpush1.msra.mxu0 0.0
        %593 = vmatprep.subr.mxu0 0.0
        %594 = vmatpush1.msra.mxu0 0.0
        %595 = vmatprep.subr.mxu0 0.0
        %596 = vmatpush1.msra.mxu0 0.0
        %597 = vmatprep.subr.mxu0 0.0
        %598 = vmatpush1.msra.mxu0 0.0
        %599 = vmatprep.subr.mxu0 0.0
        %600 = vmatpush1.msra.mxu0 0.0
        %601 = vmatprep.mubr.f32.mxu0 %v532
        %602 = vmatmul.mubr.f32.gmra.mrb[0].mxu0 %v293
        %v603 = vpop.f32.mrb[0].mxu0
        %v604 = vadd.f32 %v523, %v603
        %v605 = vpop.f32.mrb[0].mxu0
        %v606 = vadd.f32 %v523, %v605
        %607 = vmatprep.mubr.f32.mxu0 %v535
        %608 = vmatmul.mubr.f32.gmra.mrb[0].mxu0 %v295
        %v609 = vpop.f32.mrb[0].mxu0
        %v610 = vadd.f32 %v528, %v609
        %v611 = vpop.f32.mrb[0].mxu0
        %v612 = vadd.f32 %v528, %v611
        %613 = vdwg.mxu0
        %v614 = vmax.f32 %v604, 0.0
        %v615 = vmax.f32 %v606, 0.0
        %v616 = vmax.f32 %v610, 0.0
        %v617 = vmax.f32 %v612, 0.0
        %v618 = vld [vmem:[#allocation5] sm:$0xff]
        %v619 = vld [vmem:[#allocation5 + $0x8] sm:$0xff]
        %v620 = vld [vmem:[#allocation5 + $0x10] sm:$0xff]
        %v621 = vld [vmem:[#allocation5 + $0x18] sm:$0xff]
        %626 = vrot.lane.b32.xlu0 %v614, 17
        %v627 = vpop.permute.xlu0 %626
        %628 = vrot.lane.b32.xlu0 %v615, 17
        %v629 = vpop.permute.xlu0 %628
        %630 = vrot.lane.b32.xlu0 %v616, 17
        %v631 = vpop.permute.xlu0 %630
        %632 = vrot.lane.b32.xlu0 %v617, 17
        %v633 = vpop.permute.xlu0 %632
        %v634 = vsel %vm309, %v627, %v629
        %v635 = vsel %vm309, %v631, %v633
        %v642 = vsel %vm309, 0.0, %v627
        %v643 = vsel %vm309, 0.0, %v631
        %v644 = vsel %vm309, %v629, 0.0
        %v645 = vsel %vm309, %v633, 0.0
        %v646 = vsel %vm289, %v642, 0.0
        %v647 = vsel %vm290, %v634, 0.0
        %v648 = vsel %vm289, %v643, 0.0
        %v649 = vsel %vm290, %v635, 0.0
        %654 = vrot.lane.b32.xlu0 %v642, 126
        %v655 = vpop.permute.xlu0 %654
        %656 = vrot.lane.b32.xlu0 %v634, 126
        %v657 = vpop.permute.xlu0 %656
        %658 = vrot.lane.b32.xlu0 %v644, 126
        %v659 = vpop.permute.xlu0 %658
        %660 = vrot.lane.b32.xlu0 %v643, 126
        %v661 = vpop.permute.xlu0 %660
        %662 = vrot.lane.b32.xlu0 %v635, 126
        %v663 = vpop.permute.xlu0 %662
        %664 = vrot.lane.b32.xlu0 %v645, 126
        %v665 = vpop.permute.xlu0 %664
        %v666 = vsel %vm342, %v655, %v657
        %v667 = vsel %vm342, %v657, %v659
        %v668 = vsel %vm342, %v661, %v663
        %v669 = vsel %vm342, %v663, %v665
        %v674 = vsel %vm291, %v666, 0.0
        %v675 = vsel %vm292, %v667, 0.0
        %v676 = vsel %vm291, %v668, 0.0
        %v677 = vsel %vm292, %v669, 0.0
        %678 = vrot.lane.b32.xlu0 %v642, 112
        %v679 = vpop.permute.xlu0 %678
        %680 = vrot.lane.b32.xlu0 %v634, 112
        %v681 = vpop.permute.xlu0 %680
        %682 = vrot.lane.b32.xlu0 %v644, 112
        %v683 = vpop.permute.xlu0 %682
        %684 = vrot.lane.b32.xlu0 %v643, 112
        %v685 = vpop.permute.xlu0 %684
        %686 = vrot.lane.b32.xlu0 %v635, 112
        %v687 = vpop.permute.xlu0 %686
        %688 = vrot.lane.b32.xlu0 %v645, 112
        %v689 = vpop.permute.xlu0 %688
        %v690 = vsel %vm367, %v679, %v681
        %v691 = vsel %vm367, %v681, %v683
        %v692 = vsel %vm367, %v685, %v687
        %v693 = vsel %vm367, %v687, %v689
        %v698 = vsel %vm289, %v690, 0.0
        %v699 = vsel %vm290, %v691, 0.0
        %v700 = vsel %vm289, %v692, 0.0
        %v701 = vsel %vm290, %v693, 0.0
        %702 = vrot.lane.b32.xlu0 %v642, 110
        %v703 = vpop.permute.xlu0 %702
        %704 = vrot.lane.b32.xlu0 %v634, 110
        %v705 = vpop.permute.xlu0 %704
        %706 = vrot.lane.b32.xlu0 %v644, 110
        %v707 = vpop.permute.xlu0 %706
        %708 = vrot.lane.b32.xlu0 %v643, 110
        %v709 = vpop.permute.xlu0 %708
        %710 = vrot.lane.b32.xlu0 %v635, 110
        %v711 = vpop.permute.xlu0 %710
        %712 = vrot.lane.b32.xlu0 %v645, 110
        %v713 = vpop.permute.xlu0 %712
        %v714 = vsel %vm392, %v703, %v705
        %v715 = vsel %vm392, %v705, %v707
        %v716 = vsel %vm392, %v709, %v711
        %v717 = vsel %vm392, %v711, %v713
        %v722 = vsel %vm291, %v714, 0.0
        %v723 = vsel %vm292, %v715, 0.0
        %v724 = vsel %vm291, %v716, 0.0
        %v725 = vsel %vm292, %v717, 0.0
        %726 = vrot.lane.b32.xlu0 %v642, 96
        %v727 = vpop.permute.xlu0 %726
        %728 = vrot.lane.b32.xlu0 %v634, 96
        %v729 = vpop.permute.xlu0 %728
        %730 = vrot.lane.b32.xlu0 %v644, 96
        %v731 = vpop.permute.xlu0 %730
        %732 = vrot.lane.b32.xlu0 %v643, 96
        %v733 = vpop.permute.xlu0 %732
        %734 = vrot.lane.b32.xlu0 %v635, 96
        %v735 = vpop.permute.xlu0 %734
        %736 = vrot.lane.b32.xlu0 %v645, 96
        %v737 = vpop.permute.xlu0 %736
        %v738 = vsel %vm417, %v727, %v729
        %v739 = vsel %vm417, %v729, %v731
        %v740 = vsel %vm417, %v733, %v735
        %v741 = vsel %vm417, %v735, %v737
        %v746 = vsel %vm289, %v738, 0.0
        %v747 = vsel %vm290, %v739, 0.0
        %v748 = vsel %vm289, %v740, 0.0
        %v749 = vsel %vm290, %v741, 0.0
        %750 = vrot.lane.b32.xlu0 %v642, 94
        %v751 = vpop.permute.xlu0 %750
        %752 = vrot.lane.b32.xlu0 %v634, 94
        %v753 = vpop.permute.xlu0 %752
        %754 = vrot.lane.b32.xlu0 %v644, 94
        %v755 = vpop.permute.xlu0 %754
        %756 = vrot.lane.b32.xlu0 %v643, 94
        %v757 = vpop.permute.xlu0 %756
        %758 = vrot.lane.b32.xlu0 %v635, 94
        %v759 = vpop.permute.xlu0 %758
        %760 = vrot.lane.b32.xlu0 %v645, 94
        %v761 = vpop.permute.xlu0 %760
        %v762 = vsel %vm442, %v751, %v753
        %v763 = vsel %vm442, %v753, %v755
        %v764 = vsel %vm442, %v757, %v759
        %v765 = vsel %vm442, %v759, %v761
        %v770 = vsel %vm291, %v762, 0.0
        %v771 = vsel %vm292, %v763, 0.0
        %v772 = vsel %vm291, %v764, 0.0
        %v773 = vsel %vm292, %v765, 0.0
        %774 = vrot.lane.b32.xlu0 %v642, 127
        %v775 = vpop.permute.xlu0 %774
        %776 = vrot.lane.b32.xlu0 %v634, 127
        %v777 = vpop.permute.xlu0 %776
        %778 = vrot.lane.b32.xlu0 %v644, 127
        %v779 = vpop.permute.xlu0 %778
        %780 = vrot.lane.b32.xlu0 %v643, 127
        %v781 = vpop.permute.xlu0 %780
        %782 = vrot.lane.b32.xlu0 %v635, 127
        %v783 = vpop.permute.xlu0 %782
        %784 = vrot.lane.b32.xlu0 %v645, 127
        %v785 = vpop.permute.xlu0 %784
        %v786 = vsel %vm467, %v775, %v777
        %v787 = vsel %vm467, %v777, %v779
        %v788 = vsel %vm467, %v781, %v783
        %v789 = vsel %vm467, %v783, %v785
        %794 = vrot.lane.b32.xlu0 %v642, 111
        %v795 = vpop.permute.xlu0 %794
        %796 = vrot.lane.b32.xlu0 %v634, 111
        %v797 = vpop.permute.xlu0 %796
        %798 = vrot.lane.b32.xlu0 %v644, 111
        %v799 = vpop.permute.xlu0 %798
        %800 = vrot.lane.b32.xlu0 %v643, 111
        %v801 = vpop.permute.xlu0 %800
        %802 = vrot.lane.b32.xlu0 %v635, 111
        %v803 = vpop.permute.xlu0 %802
        %804 = vrot.lane.b32.xlu0 %v645, 111
        %v805 = vpop.permute.xlu0 %804
        %v806 = vsel %vm488, %v795, %v797
        %v807 = vsel %vm488, %v797, %v799
        %v808 = vsel %vm488, %v801, %v803
        %v809 = vsel %vm488, %v803, %v805
        %814 = vrot.lane.b32.xlu0 %v642, 95
        %v815 = vpop.permute.xlu0 %814
        %816 = vrot.lane.b32.xlu0 %v634, 95
        %v817 = vpop.permute.xlu0 %816
        %818 = vrot.lane.b32.xlu0 %v644, 95
        %v819 = vpop.permute.xlu0 %818
        %820 = vrot.lane.b32.xlu0 %v643, 95
        %v821 = vpop.permute.xlu0 %820
        %822 = vrot.lane.b32.xlu0 %v635, 95
        %v823 = vpop.permute.xlu0 %822
        %824 = vrot.lane.b32.xlu0 %v645, 95
        %v825 = vpop.permute.xlu0 %824
        %v826 = vsel %vm509, %v815, %v817
        %v827 = vsel %vm509, %v817, %v819
        %v828 = vsel %vm509, %v821, %v823
        %v829 = vsel %vm509, %v823, %v825
        %v834 = vld [vmem:[%s4] sm:$0xff]
        %v835 = vld [vmem:[%s4 + $0x8] sm:$0xff]
        %837 = vset.pattern.permute.xlu0 0
        %838 = vperm.xlu0 %837, %v834
        %v839 = vpop.permute.xlu0 %838
        %842 = vset.pattern.permute.xlu0 0
        %843 = vperm.xlu0 %842, %v835
        %v844 = vpop.permute.xlu0 %843
        %v847 = vsel %vm530, %v619, 0
        %v850 = vsel %vm530, %v621, 0
        %852 = vmatprep.subr.mxu0 %v647
        %853 = vmatpush1.msra.mxu0 %v646
        %854 = vmatprep.subr.mxu0 %v649
        %855 = vmatpush1.msra.mxu0 %v648
        %856 = vmatprep.subr.mxu0 %v787
        %857 = vmatpush1.msra.mxu0 %v786
        %858 = vmatprep.subr.mxu0 %v789
        %859 = vmatpush1.msra.mxu0 %v788
        %860 = vmatprep.subr.mxu0 %v675
        %861 = vmatpush1.msra.mxu0 %v674
        %862 = vmatprep.subr.mxu0 %v677
        %863 = vmatpush1.msra.mxu0 %v676
        %864 = vmatprep.subr.mxu0 %v699
        %865 = vmatpush1.msra.mxu0 %v698
        %866 = vmatprep.subr.mxu0 %v701
        %867 = vmatpush1.msra.mxu0 %v700
        %868 = vmatprep.subr.mxu0 %v807
        %869 = vmatpush1.msra.mxu0 %v806
        %870 = vmatprep.subr.mxu0 %v809
        %871 = vmatpush1.msra.mxu0 %v808
        %872 = vmatprep.subr.mxu0 %v723
        %873 = vmatpush1.msra.mxu0 %v722
        %874 = vmatprep.subr.mxu0 %v725
        %875 = vmatpush1.msra.mxu0 %v724
        %876 = vmatprep.subr.mxu0 %v747
        %877 = vmatpush1.msra.mxu0 %v746
        %878 = vmatprep.subr.mxu0 %v749
        %879 = vmatpush1.msra.mxu0 %v748
        %880 = vmatprep.subr.mxu0 %v827
        %881 = vmatpush1.msra.mxu0 %v826
        %882 = vmatprep.subr.mxu0 %v829
        %883 = vmatpush1.msra.mxu0 %v828
        %884 = vmatprep.subr.mxu0 %v771
        %885 = vmatpush1.msra.mxu0 %v770
        %886 = vmatprep.subr.mxu0 %v773
        %887 = vmatpush1.msra.mxu0 %v772
        %888 = vmatprep.subr.mxu0 0.0
        %889 = vmatpush1.msra.mxu0 0.0
        %890 = vmatprep.subr.mxu0 0.0
        %891 = vmatpush1.msra.mxu0 0.0
        %892 = vmatprep.subr.mxu0 0.0
        %893 = vmatpush1.msra.mxu0 0.0
        %894 = vmatprep.subr.mxu0 0.0
        %895 = vmatpush1.msra.mxu0 0.0
        %896 = vmatprep.subr.mxu0 0.0
        %897 = vmatpush1.msra.mxu0 0.0
        %898 = vmatprep.subr.mxu0 0.0
        %899 = vmatpush1.msra.mxu0 0.0
        %900 = vmatprep.subr.mxu0 0.0
        %901 = vmatpush1.msra.mxu0 0.0
        %902 = vmatprep.subr.mxu0 0.0
        %903 = vmatpush1.msra.mxu0 0.0
        %904 = vmatprep.subr.mxu0 0.0
        %905 = vmatpush1.msra.mxu0 0.0
        %906 = vmatprep.subr.mxu0 0.0
        %907 = vmatpush1.msra.mxu0 0.0
        %908 = vmatprep.subr.mxu0 0.0
        %909 = vmatpush1.msra.mxu0 0.0
        %910 = vmatprep.subr.mxu0 0.0
        %911 = vmatpush1.msra.mxu0 0.0
        %912 = vmatprep.subr.mxu0 0.0
        %913 = vmatpush1.msra.mxu0 0.0
        %914 = vmatprep.subr.mxu0 0.0
        %915 = vmatpush1.msra.mxu0 0.0
        %916 = vmatprep.mubr.f32.mxu0 %v847
        %917 = vmatmul.mubr.f32.gmra.mrb[0].mxu0 %v618
        %v918 = vpop.f32.mrb[0].mxu0
        %v919 = vadd.f32 %v839, %v918
        %v920 = vpop.f32.mrb[0].mxu0
        %v921 = vadd.f32 %v839, %v920
        %922 = vmatprep.mubr.f32.mxu0 %v850
        %923 = vmatmul.mubr.f32.gmra.mrb[0].mxu0 %v620
        %v924 = vpop.f32.mrb[0].mxu0
        %v925 = vadd.f32 %v844, %v924
        %v926 = vpop.f32.mrb[0].mxu0
        %v927 = vadd.f32 %v844, %v926
        %928 = vdwg.mxu0
        %v929 = vadd.f32 %v919, %v258
        %v930 = vadd.f32 %v921, %v259
        %v931 = vadd.f32 %v925, %v260
        %v932 = vadd.f32 %v927, %v261
        %v933 = vmax.f32 %v929, 0.0
        %v934 = vmax.f32 %v930, 0.0
        %v935 = vmax.f32 %v931, 0.0
        %v936 = vmax.f32 %v932, 0.0
        %937 = vst [vmem:[%s257] sm:$0xff] %v933
        %938 = vst [vmem:[%s257 + $0x8] sm:$0xff] %v934
        %939 = vst [vmem:[%s257 + $0x10] sm:$0xff] %v935
        %940 = vst [vmem:[%s257 + $0x18] sm:$0xff] %v936
        %s941 = sand.u32 %s141, 1
        %s942 = scalar_lea.sflag [#allocation4], %s941
        %s943 = sand.u32 %s141, 1
        %s944 = smul.addr %s943, 32
        %s945 = scalar_lea.vmem [#allocation7], %s944
        // Predicated region
        $region49: #{tpu_custom_call.1} parent=39 // pred_check
          %p946 = pneg %p151
        $region50: #{tpu_custom_call.1} parent=39 // pred_check_branch
          %948 = sbr.rel (%p946) target = $region52
        $region51: #{tpu_custom_call.1} parent=39 // pred_region
          %s950 = ssub.s32 512, 512
          %951 = vsyncadd %s942, %s950
          %s952 = smul.addr %s23, 4
          %s953 = smul.addr %s952, 128
          %s954 = scalar_lea.hbm %s5, %s953
          %s955 = sshll.u32 %s945, 4
          %s956 = int_to_ptr.vmem [resolvable:$true] %s955
          %961 = dma.vmem_to_hbm [thread:$0]  %s956, 512, %s954, %s942, 256, 256, 16
        $region52: #{tpu_custom_call.1} parent=39 // pred_fallthru
          _
      $region40: #{tpu_custom_call.1} parent=5 // pred_fallthru
        _
      %p962 = scmp.le.s32.totalorder 2, %s18
      // Predicated region
      $region53: #{tpu_custom_call.1} parent=5 // pred_check
        %p963 = pneg %p962
      $region54: #{tpu_custom_call.1} parent=5 // pred_check_branch
        %965 = sbr.rel (%p963) target = $region56
      $region55: #{tpu_custom_call.1} parent=5 // pred_region
        %s966 = ssub.s32 %s18, 2
        // Predicated region
        $region57: #{tpu_custom_call.1} parent=55 // pred_check
          %p967 = pneg %p157
        $region58: #{tpu_custom_call.1} parent=55 // pred_check_branch
          %969 = sbr.rel (%p967) target = $region60
        $region59: #{tpu_custom_call.1} parent=55 // pred_region
          %s970 = sand.u32 %s142, 1
          %s971 = scalar_lea.sflag [#allocation4], %s970
          %s972 = sand.u32 %s142, 1
          %s973 = smul.addr %s972, 32
          %s974 = scalar_lea.vmem [#allocation7], %s973
          %975 = dma.done %s971, 512
        $region60: #{tpu_custom_call.1} parent=55 // pred_fallthru
          _
      $region56: #{tpu_custom_call.1} parent=5 // pred_fallthru
        _
    $region6: #{tpu_custom_call.1} parent=1 // loop_footer
      %s22 = sadd.s32 1, %s18
    $region7: #{tpu_custom_call.1} parent=1 // loop_footer_branch
      %17 = sbr.rel target = $region3
    $region8: #{tpu_custom_call.1} parent=1 // loop_exit
      _
    %976 = vsyncpa [#allocation3], 1
    %s977 = scalar_lea.sflag [#allocation3], 1
    %978 = vsyncpa %s977, 1
    %979 = vsyncpa [#allocation6], 1
    %980 = vsyncpa [#allocation4], 1
    %s981 = scalar_lea.sflag [#allocation4], 1
    %982 = vsyncpa %s981, 1

</llo_original>
